<compile_context>
chip_gen: v7x
topology: tpu7x:2x2x1
jax: 0.10.0
libtpu: 0.0.40
codegen_flags: <defaults>
</compile_context>

<pallas_src>
import functools

import jax
import jax.numpy as jnp
import numpy as np
from jax.experimental import pallas as pl
from jax.experimental.pallas import tpu as pltpu

GEM_EPS = 1e-6


def _delg_kernel(f_ref, wl_ref, bl_ref, wa_ref, ba_ref,
                 psum_ref, local_ref, att_ref, attended_ref,
                 *, gem_p):
    """One (batch, hw_split, hw_tile) grid step.

    f_ref:        (1, T, C)   bf16 backbone features (channels-last tile)
    wl_ref:       (C, Ld)     bf16 local 1x1-conv weight
    bl_ref:       (1, Ld)     f32  local 1x1-conv bias
    wa_ref:       (1, C)      f32  attention 1x1-conv weight (row layout)
    ba_ref:       (1, 1)      f32  attention bias
    psum_ref:     (1, 1, C)   f32  GeM p-power sum (output-resident accumulator)
    local_ref:    (1, T, Ld)  bf16 local features
    att_ref:      (1, T, 1)   f32  attention map (sigmoid)
    attended_ref: (1, T, Ld)  bf16 attended = local * att
    """
    t = pl.program_id(2)
    f_bf = f_ref[0]                                     # (T, C) bf16 (MXU path)
    f32 = f_bf.astype(jnp.float32)                      # (T, C) f32 (VPU path)

    # ---- GeM p-power partial sum, accumulated into the resident output ----
    xc = jnp.maximum(f32, GEM_EPS)
    if gem_p == 3.0:                                    # trace-time check
        xp = xc * xc * xc
    else:
        xp = jnp.exp(gem_p * jnp.log(xc))
    tile_sum = jnp.sum(xp, axis=0, keepdims=True)       # (1, C) sublane reduce

    @pl.when(t == 0)
    def _():
        psum_ref[...] = jnp.zeros_like(psum_ref)

    psum_ref[...] += tile_sum[None, :, :]

    # ---- attention 1x1 conv on VPU + XLU lane-reduce (hidden under MXU) ----
    att_logit = jnp.sum(f32 * wa_ref[...], axis=-1, keepdims=True)    # (T, 1)
    att = jax.nn.sigmoid(att_logit + ba_ref[...])                     # (T, 1)

    # ---- local 1x1 conv: bf16 MXU matmul, f32 accumulation ----
    local = jnp.dot(f_bf, wl_ref[...],
                    preferred_element_type=jnp.float32) + bl_ref[...]  # (T, Ld)

    local_ref[0] = local.astype(local_ref.dtype)
    # TODO(synk): att output is last-dim-1 (masked vst); a lane-dense (1, T)
    # layout would be marginally faster but needs an in-kernel relayout.
    att_ref[0] = att
    attended_ref[0] = (local * att).astype(attended_ref.dtype)


def _round_up(n, m):
    return ((n + m - 1) // m) * m


def _vmem_estimate(T, C, Ld, *, weight_buffers=1, feature_buffers=2):
    """Rough VMEM bytes for one pipelined step (lane/sublane padded)."""
    c_pad = _round_up(C, 128)
    l_pad = _round_up(Ld, 128)
    b = 0
    b += feature_buffers * T * c_pad * 2            # bf16 feature input
    b += 2 * T * l_pad * 2                          # local output (bf16)
    b += 2 * T * l_pad * 2                          # attended output (bf16)
    b += 2 * T * 128 * 4                            # attention output (f32, lane pad)
    b += 2 * 8 * c_pad * 4                          # psum output (f32, sublane pad)
    b += weight_buffers * (_round_up(C, 8) * l_pad * 2   # wl (bf16)
                           + 8 * l_pad * 4               # bl
                           + 8 * c_pad * 4               # wa
                           + 8 * 128 * 4)                # ba
    return b


_TILE_CANDIDATES = (2048, 1536, 1024, 768, 512, 384, 256, 192, 128, 96, 64, 48,
                    32, 24, 16, 8)


def _pick_hw_tile(hw, C, Ld, max_rows, vmem_budget, **est_kw):
    """Largest HW tile that divides hw, is 8-aligned and fits the VMEM budget."""
    for t in _TILE_CANDIDATES:
        if (t <= max_rows and t <= hw and hw % t == 0
                and _vmem_estimate(t, C, Ld, **est_kw) <= vmem_budget):
            return t
    # TODO(synk): ragged HW (no aligned divisor) falls back to a single
    # full-HW block; very large odd feature maps may exceed the VMEM budget.
    return hw


def _tpu_vmem_capacity_bytes():
    # Capability probe only; default to the smallest-VMEM generation (v7x).
    try:
        return int(pltpu.get_tpu_info().vmem_capacity_bytes)
    except Exception:
        return 64 * 1024 * 1024


def _const_spec(shape, buffers):
    """BlockSpec for a grid-invariant (weight/bias) operand."""
    idx = lambda b, s, t: tuple(0 for _ in shape)
    if buffers != 2 and hasattr(pl, "Buffered"):
        return pl.BlockSpec(shape, idx, pipeline_mode=pl.Buffered(buffers))
    return pl.BlockSpec(shape, idx)


def delg_forward(features, params, gem_p=3.0, channels_last=False,
                 max_hw_tile_rows=1024, nchw_extras=False, feature_buffers=2):
    """DELGWrapper.forward (eval mode) starting from backbone feature maps.

    features: (B, C, H, W) (or (B, H, W, C) if channels_last=True; prefer a
              bf16 NHWC backbone output to skip the cast + transpose).
    Returns ((None, logits), extras). Extras are channels-last by default
    (nchw_extras=True reproduces the PyTorch NCHW layout at the cost of three
    extra HBM transpose passes).
    """
    if channels_last:
        B, H, W, C = features.shape
        f = features.astype(jnp.bfloat16).reshape(B, H * W, C)
    else:
        B, C, H, W = features.shape
        # Cast before the transpose so the NCHW->NHWC relayout moves bf16.
        f = jnp.transpose(features.astype(jnp.bfloat16),
                          (0, 2, 3, 1)).reshape(B, H * W, C)
    HW = H * W

    wl = params["wl"].astype(jnp.bfloat16)                  # (C, Ld)
    bl = params["bl"].astype(jnp.float32)                   # (1, Ld)
    wa = params["wa"].astype(jnp.float32).reshape(1, C)     # (1, C) row layout
    ba = params["ba"].astype(jnp.float32).reshape(1, 1)     # (1, 1)
    Ld = wl.shape[1]

    weight_buffers = 1 if hasattr(pl, "Buffered") else 2
    cap = _tpu_vmem_capacity_bytes()
    budget = int(0.75 * cap)
    T = _pick_hw_tile(HW, C, Ld, max_hw_tile_rows, budget,
                      weight_buffers=weight_buffers,
                      feature_buffers=feature_buffers)
    est = _vmem_estimate(T, C, Ld, weight_buffers=weight_buffers,
                         feature_buffers=feature_buffers)
    vmem_limit = int(min(0.9 * cap, max(budget, est + (4 << 20))))

    n_t = HW // T
    # Split the HW axis into a second "parallel" grid axis so both v7x
    # TensorCores get work even when B == 1 (no-op cost on v5e/v6e).
    n_split = 2 if (n_t % 2 == 0 and n_t >= 2) else 1
    ntp = n_t // n_split

    out_shape = (
        jax.ShapeDtypeStruct((B * n_split, 1, C), jnp.float32),  # GeM p-power sums
        jax.ShapeDtypeStruct((B, HW, Ld), jnp.bfloat16),         # local features
        jax.ShapeDtypeStruct((B, HW, 1), jnp.float32),           # attention map
        jax.ShapeDtypeStruct((B, HW, Ld), jnp.bfloat16),         # attended local
    )

    feat_idx = lambda b, s, t: (b, s * ntp + t, 0)
    if feature_buffers != 2 and hasattr(pl, "Buffered"):
        feat_spec = pl.BlockSpec((1, T, C), feat_idx,
                                 pipeline_mode=pl.Buffered(feature_buffers))
    else:
        feat_spec = pl.BlockSpec((1, T, C), feat_idx)

    grid_spec = pltpu.PrefetchScalarGridSpec(
        num_scalar_prefetch=0,
        grid=(B, n_split, ntp),
        in_specs=[
            feat_spec,
            _const_spec(wl.shape, weight_buffers),
            _const_spec(bl.shape, weight_buffers),
            _const_spec(wa.shape, weight_buffers),
            _const_spec(ba.shape, weight_buffers),
        ],
        out_specs=[
            pl.BlockSpec((1, 1, C), lambda b, s, t: (b * n_split + s, 0, 0)),
            pl.BlockSpec((1, T, Ld), feat_idx),
            pl.BlockSpec((1, T, 1), feat_idx),
            pl.BlockSpec((1, T, Ld), feat_idx),
        ],
    )

    psum, local, att, attended = pl.pallas_call(
        functools.partial(_delg_kernel, gem_p=gem_p),
        out_shape=out_shape,
        grid_spec=grid_spec,
        compiler_params=pltpu.CompilerParams(
            dimension_semantics=("parallel", "parallel", "arbitrary"),
            vmem_limit_bytes=vmem_limit),
    )(f, wl, bl, wa, ba)

    # --- global branch hoisted out of the kernel (M=B matmuls, f32) ---
    gem_sum = psum.reshape(B, n_split, C).sum(axis=1)        # (B, C)
    pooled = (gem_sum / HW) ** (1.0 / gem_p)                 # GeM pooling
    g = pooled @ params["wg"] + params["bg"]                 # (B, Gd)
    logits = g @ params["wc"] + params["bc"]                 # (B, NC)

    local_nhwc = local.reshape(B, H, W, Ld)
    att_nhwc = att.reshape(B, H, W, 1)
    attended_nhwc = attended.reshape(B, H, W, Ld)
    if nchw_extras:
        to_nchw = lambda x: jnp.transpose(x, (0, 3, 1, 2))
        extras = {"local_features": to_nchw(local_nhwc),
                  "attention_map": to_nchw(att_nhwc),
                  "attended_local": to_nchw(attended_nhwc)}
    else:
        extras = {"local_features": local_nhwc,
                  "attention_map": att_nhwc,
                  "attended_local": attended_nhwc}
    return (None, logits), extras


# ----------------------------- references -----------------------------------

def _reference_logits(features_nchw, params, gem_p=3.0):
    """Pure-JAX f32 reference of the PyTorch forward (logits only)."""
    B, C, H, W = features_nchw.shape
    f = features_nchw.astype(jnp.float32).reshape(B, C, H * W)
    pooled = jnp.mean(jnp.clip(f, GEM_EPS, None) ** gem_p, axis=2) ** (1.0 / gem_p)
    g = pooled @ params["wg"] + params["bg"]
    return g @ params["wc"] + params["bc"]


def _reference_local(features_nchw, params):
    """Pure-JAX f32 reference of the local extractor (NCHW outputs)."""
    B, C, H, W = features_nchw.shape
    fhw = jnp.transpose(features_nchw.astype(jnp.float32).reshape(B, C, H * W),
                        (0, 2, 1))                               # (B, HW, C)
    wl = params["wl"].astype(jnp.bfloat16).astype(jnp.float32)
    local = fhw @ wl + params["bl"]                              # (B, HW, Ld)
    att = jax.nn.sigmoid(fhw @ params["wa"] + params["ba"])      # (B, HW, 1)
    attended = local * att

    def to_nchw(x):
        return jnp.transpose(x.reshape(B, H, W, -1), (0, 3, 1, 2))

    return to_nchw(local), to_nchw(att), to_nchw(attended)


def _init_params(key, backbone_dim, global_dim, local_dim, num_classes):
    ks = jax.random.split(key, 8)
    s = 0.02
    return {
        "wg": s * jax.random.normal(ks[0], (backbone_dim, global_dim), jnp.float32),
        "bg": s * jax.random.normal(ks[1], (1, global_dim), jnp.float32),
        "wc": s * jax.random.normal(ks[2], (global_dim, num_classes), jnp.float32),
        "bc": s * jax.random.normal(ks[3], (1, num_classes), jnp.float32),
        "wl": s * jax.random.normal(ks[4], (backbone_dim, local_dim), jnp.float32),
        "bl": s * jax.random.normal(ks[5], (1, local_dim), jnp.float32),
        "wa": s * jax.random.normal(ks[6], (backbone_dim, 1), jnp.float32),
        "ba": s * jax.random.normal(ks[7], (1, 1), jnp.float32),
    }


if __name__ == "__main__":
    # Small synthetic shapes (stand-ins for backbone_dim=2048, global_dim=2048,
    # local_dim=1024, num_classes=1000 of the real module).  max_hw_tile_rows=64
    # with HW=256 exercises the multi-tile GeM accumulation and the hw-split
    # (grid = (2, 2, 2)).
    B, C, H, W = 2, 256, 16, 16        # backbone feature maps (NCHW)
    GLOBAL_DIM, LOCAL_DIM, NUM_CLASSES = 128, 128, 16
    GEM_P = 3.0

    key = jax.random.PRNGKey(0)
    k_feat, k_par = jax.random.split(key)
    # Positive-ish activations, like post-ReLU ResNet features.
    features = jax.nn.relu(jax.random.normal(k_feat, (B, C, H, W), jnp.float32))
    params = _init_params(k_par, C, GLOBAL_DIM, LOCAL_DIM, NUM_CLASSES)

    (loss, logits), extras = delg_forward(features, params, gem_p=GEM_P,
                                          max_hw_tile_rows=64, nchw_extras=True)
    logits = jax.block_until_ready(logits)
    jax.block_until_ready(extras["attended_local"])

    # References computed from the same bf16-rounded features (the kernel's
    # actual numeric input), all math in f32.
    f_bf = features.astype(jnp.bfloat16).astype(jnp.float32)

    ref_logits = jax.block_until_ready(_reference_logits(f_bf, params, GEM_P))
    np.testing.assert_allclose(np.asarray(logits), np.asarray(ref_logits),
                               rtol=2e-3, atol=2e-4)

    ref_local, ref_att, ref_attended = _reference_local(f_bf, params)
    np.testing.assert_allclose(np.asarray(extras["attention_map"]),
                               np.asarray(ref_att), rtol=1e-3, atol=1e-4)
    np.testing.assert_allclose(
        np.asarray(extras["local_features"].astype(jnp.float32)),
        np.asarray(ref_local), rtol=2e-2, atol=1e-2)
    np.testing.assert_allclose(
        np.asarray(extras["attended_local"].astype(jnp.float32)),
        np.asarray(ref_attended), rtol=2e-2, atol=1e-2)

    assert loss is None
    assert logits.shape == (B, NUM_CLASSES)
    assert extras["local_features"].shape == (B, LOCAL_DIM, H, W)
    assert extras["attention_map"].shape == (B, 1, H, W)
    assert extras["attended_local"].shape == (B, LOCAL_DIM, H, W)

    print("KERNEL_OK")
</pallas_src>

<mosaic_0001>
module attributes {stable_mosaic.version = 11 : i64} {
  func.func @_delg_kernel(%arg0: i32, %arg1: i32, %arg2: i32, %arg3: memref<1x64x256xbf16, #tpu.memory_space<vmem>>, %arg4: memref<256x128xbf16, #tpu.memory_space<vmem>>, %arg5: memref<1x128xf32, #tpu.memory_space<vmem>>, %arg6: memref<1x256xf32, #tpu.memory_space<vmem>>, %arg7: memref<1x1xf32, #tpu.memory_space<vmem>>, %arg8: memref<1x1x256xf32, #tpu.memory_space<vmem>>, %arg9: memref<1x64x128xbf16, #tpu.memory_space<vmem>>, %arg10: memref<1x64x1xf32, #tpu.memory_space<vmem>>, %arg11: memref<1x64x128xbf16, #tpu.memory_space<vmem>>) attributes {dimension_semantics = [#tpu.dimension_semantics<parallel>, #tpu.dimension_semantics<parallel>, #tpu.dimension_semantics<arbitrary>], iteration_bounds = array<i64: 2, 2, 2>, scalar_prefetch = 0 : i64, scratch_operands = 0 : i64, tpu.core_type = #tpu.core_type<tc>, window_params = [{transform_indices = @transform_0, window_bounds = array<i64: 1, 64, 256>}, {pipeline_mode = #tpu.pipeline_mode<synchronous>, transform_indices = @transform_1, window_bounds = array<i64: 256, 128>}, {pipeline_mode = #tpu.pipeline_mode<synchronous>, transform_indices = @transform_2, window_bounds = array<i64: 1, 128>}, {pipeline_mode = #tpu.pipeline_mode<synchronous>, transform_indices = @transform_3, window_bounds = array<i64: 1, 256>}, {pipeline_mode = #tpu.pipeline_mode<synchronous>, transform_indices = @transform_4, window_bounds = array<i64: 1, 1>}, {transform_indices = @transform_5, window_bounds = array<i64: 1, 1, 256>}, {transform_indices = @transform_6, window_bounds = array<i64: 1, 64, 128>}, {transform_indices = @transform_7, window_bounds = array<i64: 1, 64, 1>}, {transform_indices = @transform_8, window_bounds = array<i64: 1, 64, 128>}]} {
    %c0 = arith.constant 0 : index
    %c0_0 = arith.constant 0 : index
    %c0_1 = arith.constant 0 : index
    %0 = vector.load %arg3[%c0, %c0_0, %c0_1] : memref<1x64x256xbf16, #tpu.memory_space<vmem>>, vector<1x64x256xbf16>
    %1 = vector.shape_cast %0 : vector<1x64x256xbf16> to vector<64x256xbf16>
    %2 = arith.extf %1 : vector<64x256xbf16> to vector<64x256xf32>
    %cst = arith.constant 9.99999997E-7 : f32
    %3 = vector.broadcast %cst : f32 to vector<64x256xf32>
    %4 = arith.maximumf %2, %3 : vector<64x256xf32>
    %5 = arith.mulf %4, %4 : vector<64x256xf32>
    %6 = arith.mulf %5, %4 : vector<64x256xf32>
    %cst_2 = arith.constant dense<0.000000e+00> : vector<256xf32>
    %7 = vector.multi_reduction <add>, %6, %cst_2 [0] : vector<64x256xf32> to vector<256xf32>
    %8 = vector.shape_cast %7 : vector<256xf32> to vector<1x256xf32>
    %c0_i32 = arith.constant 0 : i32
    %9 = arith.cmpi eq, %arg2, %c0_i32 : i32
    %10 = arith.extui %9 : i1 to i32
    %c0_i32_3 = arith.constant 0 : i32
    %11 = arith.cmpi ne, %10, %c0_i32_3 : i32
    scf.if %11 {
      %cst_30 = arith.constant 0.000000e+00 : f32
      %47 = vector.broadcast %cst_30 : f32 to vector<1x1x256xf32>
      %c0_31 = arith.constant 0 : index
      %c0_32 = arith.constant 0 : index
      %c0_33 = arith.constant 0 : index
      %48 = vector.load %arg8[%c0_31, %c0_32, %c0_33] : memref<1x1x256xf32, #tpu.memory_space<vmem>>, vector<1x1x256xf32>
      tpu.vector_store %arg8[%c0_31, %c0_32, %c0_33], %47 {strides = array<i32>} : memref<1x1x256xf32, #tpu.memory_space<vmem>>, vector<1x1x256xf32>,
    } else {
    }
    %c0_4 = arith.constant 0 : index
    %c0_5 = arith.constant 0 : index
    %c0_6 = arith.constant 0 : index
    %12 = vector.load %arg8[%c0_4, %c0_5, %c0_6] : memref<1x1x256xf32, #tpu.memory_space<vmem>>, vector<1x1x256xf32>
    %13 = vector.shape_cast %8 : vector<1x256xf32> to vector<1x1x256xf32>
    %14 = arith.addf %12, %13 : vector<1x1x256xf32>
    %c0_7 = arith.constant 0 : index
    %c0_8 = arith.constant 0 : index
    %c0_9 = arith.constant 0 : index
    %15 = vector.load %arg8[%c0_7, %c0_8, %c0_9] : memref<1x1x256xf32, #tpu.memory_space<vmem>>, vector<1x1x256xf32>
    tpu.vector_store %arg8[%c0_7, %c0_8, %c0_9], %14 {strides = array<i32>} : memref<1x1x256xf32, #tpu.memory_space<vmem>>, vector<1x1x256xf32>,
    %c0_10 = arith.constant 0 : index
    %c0_11 = arith.constant 0 : index
    %16 = vector.load %arg6[%c0_10, %c0_11] : memref<1x256xf32, #tpu.memory_space<vmem>>, vector<1x256xf32>
    %17 = vector.broadcast %16 : vector<1x256xf32> to vector<64x256xf32>
    %18 = arith.mulf %2, %17 : vector<64x256xf32>
    %cst_12 = arith.constant dense<0.000000e+00> : vector<64xf32>
    %19 = vector.multi_reduction <add>, %18, %cst_12 [1] : vector<64x256xf32> to vector<64xf32>
    %20 = vector.shape_cast %19 : vector<64xf32> to vector<64x1xf32>
    %c0_13 = arith.constant 0 : index
    %c0_14 = arith.constant 0 : index
    %21 = vector.load %arg7[%c0_13, %c0_14] : memref<1x1xf32, #tpu.memory_space<vmem>>, vector<1x1xf32>
    %22 = vector.broadcast %21 : vector<1x1xf32> to vector<64x1xf32>
    %23 = arith.addf %20, %22 : vector<64x1xf32>
    %24 = arith.negf %23 : vector<64x1xf32>
    %25 = math.exp %24 : vector<64x1xf32>
    %cst_15 = arith.constant 1.000000e+00 : f32
    %26 = vector.broadcast %cst_15 : f32 to vector<64x1xf32>
    %27 = arith.addf %26, %25 : vector<64x1xf32>
    %28 = arith.divf %26, %27 : vector<64x1xf32>
    %c0_16 = arith.constant 0 : index
    %c0_17 = arith.constant 0 : index
    %29 = vector.load %arg4[%c0_16, %c0_17] : memref<256x128xbf16, #tpu.memory_space<vmem>>, vector<256x128xbf16>
    %cst_18 = arith.constant dense<0.000000e+00> : vector<64x128xf32>
    %30 = tpu.matmul %1, %29, %cst_18 {dimension_numbers = #tpu.dot_dimension_numbers<[1], [0], [0], [1], [0, 0, 1, 1], [], []>} : vector<64x256xbf16>, vector<256x128xbf16>, vector<64x128xf32> -> vector<64x128xf32>
    %c0_19 = arith.constant 0 : index
    %c0_20 = arith.constant 0 : index
    %31 = vector.load %arg5[%c0_19, %c0_20] : memref<1x128xf32, #tpu.memory_space<vmem>>, vector<1x128xf32>
    %32 = vector.broadcast %31 : vector<1x128xf32> to vector<64x128xf32>
    %33 = arith.addf %30, %32 : vector<64x128xf32>
    %34 = arith.truncf %33 : vector<64x128xf32> to vector<64x128xbf16>
    %c0_21 = arith.constant 0 : index
    %c0_22 = arith.constant 0 : index
    %c0_23 = arith.constant 0 : index
    %35 = vector.load %arg9[%c0_21, %c0_22, %c0_23] : memref<1x64x128xbf16, #tpu.memory_space<vmem>>, vector<1x64x128xbf16>
    %36 = vector.shape_cast %35 : vector<1x64x128xbf16> to vector<64x128xbf16>
    %37 = vector.shape_cast %34 : vector<64x128xbf16> to vector<1x64x128xbf16>
    tpu.vector_store %arg9[%c0_21, %c0_22, %c0_23], %37 {strides = array<i32>} : memref<1x64x128xbf16, #tpu.memory_space<vmem>>, vector<1x64x128xbf16>,
    %c0_24 = arith.constant 0 : index
    %c0_25 = arith.constant 0 : index
    %c0_26 = arith.constant 0 : index
    %38 = vector.load %arg10[%c0_24, %c0_25, %c0_26] : memref<1x64x1xf32, #tpu.memory_space<vmem>>, vector<1x64x1xf32>
    %39 = vector.shape_cast %38 : vector<1x64x1xf32> to vector<64x1xf32>
    %40 = vector.shape_cast %28 : vector<64x1xf32> to vector<1x64x1xf32>
    tpu.vector_store %arg10[%c0_24, %c0_25, %c0_26], %40 {strides = array<i32>} : memref<1x64x1xf32, #tpu.memory_space<vmem>>, vector<1x64x1xf32>,
    %41 = vector.broadcast %28 : vector<64x1xf32> to vector<64x128xf32>
    %42 = arith.mulf %33, %41 : vector<64x128xf32>
    %43 = arith.truncf %42 : vector<64x128xf32> to vector<64x128xbf16>
    %c0_27 = arith.constant 0 : index
    %c0_28 = arith.constant 0 : index
    %c0_29 = arith.constant 0 : index
    %44 = vector.load %arg11[%c0_27, %c0_28, %c0_29] : memref<1x64x128xbf16, #tpu.memory_space<vmem>>, vector<1x64x128xbf16>
    %45 = vector.shape_cast %44 : vector<1x64x128xbf16> to vector<64x128xbf16>
    %46 = vector.shape_cast %43 : vector<64x128xbf16> to vector<1x64x128xbf16>
    tpu.vector_store %arg11[%c0_27, %c0_28, %c0_29], %46 {strides = array<i32>} : memref<1x64x128xbf16, #tpu.memory_space<vmem>>, vector<1x64x128xbf16>,
    return
  }
  func.func @transform_0(%arg0: i32, %arg1: i32, %arg2: i32) -> (i32, i32, i32) {
    %c2_i32 = arith.constant 2 : i32
    %0 = arith.muli %arg1, %c2_i32 : i32
    %1 = arith.addi %0, %arg2 : i32
    %c0_i32 = arith.constant 0 : i32
    %c0_i32_0 = arith.constant 0 : i32
    return %arg0, %1, %c0_i32 : i32, i32, i32
  }
  func.func @transform_1(%arg0: i32, %arg1: i32, %arg2: i32) -> (i32, i32) {
    %c0_i32 = arith.constant 0 : i32
    %c0_i32_0 = arith.constant 0 : i32
    %c0_i32_1 = arith.constant 0 : i32
    return %c0_i32, %c0_i32_0 : i32, i32
  }
  func.func @transform_2(%arg0: i32, %arg1: i32, %arg2: i32) -> (i32, i32) {
    %c0_i32 = arith.constant 0 : i32
    %c0_i32_0 = arith.constant 0 : i32
    %c0_i32_1 = arith.constant 0 : i32
    return %c0_i32, %c0_i32_0 : i32, i32
  }
  func.func @transform_3(%arg0: i32, %arg1: i32, %arg2: i32) -> (i32, i32) {
    %c0_i32 = arith.constant 0 : i32
    %c0_i32_0 = arith.constant 0 : i32
    %c0_i32_1 = arith.constant 0 : i32
    return %c0_i32, %c0_i32_0 : i32, i32
  }
  func.func @transform_4(%arg0: i32, %arg1: i32, %arg2: i32) -> (i32, i32) {
    %c0_i32 = arith.constant 0 : i32
    %c0_i32_0 = arith.constant 0 : i32
    %c0_i32_1 = arith.constant 0 : i32
    return %c0_i32, %c0_i32_0 : i32, i32
  }
  func.func @transform_5(%arg0: i32, %arg1: i32, %arg2: i32) -> (i32, i32, i32) {
    %c2_i32 = arith.constant 2 : i32
    %0 = arith.muli %arg0, %c2_i32 : i32
    %1 = arith.addi %0, %arg1 : i32
    %c0_i32 = arith.constant 0 : i32
    %c0_i32_0 = arith.constant 0 : i32
    %c0_i32_1 = arith.constant 0 : i32
    return %1, %c0_i32, %c0_i32_0 : i32, i32, i32
  }
  func.func @transform_6(%arg0: i32, %arg1: i32, %arg2: i32) -> (i32, i32, i32) {
    %c2_i32 = arith.constant 2 : i32
    %0 = arith.muli %arg1, %c2_i32 : i32
    %1 = arith.addi %0, %arg2 : i32
    %c0_i32 = arith.constant 0 : i32
    %c0_i32_0 = arith.constant 0 : i32
    return %arg0, %1, %c0_i32 : i32, i32, i32
  }
  func.func @transform_7(%arg0: i32, %arg1: i32, %arg2: i32) -> (i32, i32, i32) {
    %c2_i32 = arith.constant 2 : i32
    %0 = arith.muli %arg1, %c2_i32 : i32
    %1 = arith.addi %0, %arg2 : i32
    %c0_i32 = arith.constant 0 : i32
    %c0_i32_0 = arith.constant 0 : i32
    return %arg0, %1, %c0_i32 : i32, i32, i32
  }
  func.func @transform_8(%arg0: i32, %arg1: i32, %arg2: i32) -> (i32, i32, i32) {
    %c2_i32 = arith.constant 2 : i32
    %0 = arith.muli %arg1, %c2_i32 : i32
    %1 = arith.addi %0, %arg2 : i32
    %c0_i32 = arith.constant 0 : i32
    %c0_i32_0 = arith.constant 0 : i32
    return %arg0, %1, %c0_i32 : i32, i32, i32
  }
}

</mosaic_0001>

<llo_original>
// kernel: tpu_custom_call.1
$region0: #{tpu_custom_call.1}
  #allocation0 [shape = 'u32[]', space=smem, size = 0x4, offset = 0x4, fixed_abs, tag = 'smem constant byte address 0x4 - core index']
  #allocation1 [shape = 'u32[144,128]{1,0:T(1,128)}', space=vmem, size = 0x12000, scoped, tag = 'internal scratch']
  #allocation2 [shape = 'f32[1,1]{1,0:T(1,128)S(1)}', space=vmem, size = 0x200, scoped, tag = 'scoped memory for tpu_custom_call.1']
  %s0 = inlined_call_operand.hbm [shape: bf16[2,256,256], index: 0, kind: input, shape index: {}]
  %s1 = inlined_call_operand.hbm [shape: bf16[256,128], index: 1, kind: input, shape index: {}]
  %s2 = inlined_call_operand.vmem [shape: f32[1,128], index: 2, kind: input, shape index: {}]
  %s3 = inlined_call_operand.vmem [shape: f32[1,256], index: 3, kind: input, shape index: {}]
  %s4 = inlined_call_operand.<no memory space> [shape: f32[1,1], index: 4, kind: input, shape index: {}]
  %s5 = inlined_call_operand.hbm [shape: f32[4,1,256], index: 5, kind: output, shape index: {0}]
  %s6 = inlined_call_operand.hbm [shape: bf16[2,256,128], index: 6, kind: output, shape index: {1}]
  %s7 = inlined_call_operand.vmem [shape: f32[2,256,1], index: 7, kind: output, shape index: {2}]
  %s8 = inlined_call_operand.hbm [shape: bf16[2,256,128], index: 8, kind: output, shape index: {3}]
  %9 = xla_tuple %s5, %s6, %s7, %s8
  %s10 = sld [smem:[#allocation0]]
  $region89: #{tpu_custom_call.1} parent=0
    _
  %s12 = ssub.s32 1, %s10
  %s13 = scalar_select 0, %s12, %s10
  %v14 = vstv %s4
  %15 = vst [vmem:[#allocation2] sm:$0x1] %v14
  $region1: #{tpu_custom_call.1} parent=0
    #allocation3 [shape = 'u8[65536]{0}', space=vmem, size = 0x10000, scoped, tag = 'input window, operand 0']
    #allocation4 [shape = 's32[2]{0}', space=sflag, size = 0x8, scoped, tag = 'scoped memory for tpu_custom_call.1']
    #allocation5 [shape = 's32[2]{0}', space=sflag, size = 0x8, scoped, tag = 'scoped memory for tpu_custom_call.1']
    #allocation6 [shape = 'u8[65536]{0}', space=vmem, size = 0x10000, scoped, tag = 'input window, operand 1, single buffered']
    #allocation7 [shape = 's32[1]{0}', space=sflag, size = 0x4, scoped, tag = 'scoped memory for tpu_custom_call.1']
    #allocation8 [shape = 'u8[2048]{0}', space=vmem, size = 0x800, scoped, tag = 'output window, operand 0']
    #allocation9 [shape = 'u8[32768]{0}', space=vmem, size = 0x8000, scoped, tag = 'output window, operand 1']
    #allocation10 [shape = 's32[2]{0}', space=sflag, size = 0x8, scoped, tag = 'scoped memory for tpu_custom_call.1']
    #allocation11 [shape = 'u8[32768]{0}', space=vmem, size = 0x8000, scoped, tag = 'output window, operand 3']
    %16 = vsyncpa [#allocation4], 0
    %s17 = scalar_lea.sflag [#allocation4], 1
    %18 = vsyncpa %s17, 0
    %19 = vsyncpa [#allocation7], 0
    %20 = vsyncpa [#allocation5], 0
    %s21 = scalar_lea.sflag [#allocation5], 1
    %22 = vsyncpa %s21, 0
    %23 = vsyncpa [#allocation10], 0
    %s24 = scalar_lea.sflag [#allocation10], 1
    %25 = vsyncpa %s24, 0
    loop: start=0, step=1, limit=10
    $region2: #{tpu_custom_call.1} parent=1 // loop_pre_header
      _
    $region3: #{tpu_custom_call.1} parent=1 // loop_header
      %s27 = sphi 0, %s31
      %p28 = scmp.ge.s32.totalorder %s27, 10
      %s34 = sphi 0, %s53
      %s35 = sphi 0, %s49
      %s36 = sphi 0, %s45
      %s37 = sphi 0, %s34
      %s38 = sphi 0, %s35
      %s39 = sphi 0, %s36
      %s40 = sphi 0, %s37
      %s41 = sphi 0, %s38
      %s42 = sphi 0, %s39
      %s62 = sphi 0, %s64
      %s65 = sphi 0, %s62
      %s66 = sphi 0, %s65
      %s82 = sphi 0, %s66
      %s86 = sphi 0, %s86
      %s88 = sphi 0, %s86
      %s89 = sphi 0, %s88
      %s103 = sphi 0, %s89
      %s107 = sphi 0, %s107
      %s109 = sphi 0, %s107
      %s110 = sphi 0, %s109
      %s124 = sphi 0, %s110
      %s128 = sphi 0, %s128
      %s130 = sphi 0, %s128
      %s131 = sphi 0, %s130
      %s145 = sphi 0, %s131
      %s149 = sphi 0, %s149
      %s151 = sphi 0, %s149
      %s152 = sphi 0, %s151
      %s166 = sphi 0, %s152
      %s176 = sphi 0, %s178
      %s179 = sphi 0, %s176
      %s180 = sphi 0, %s179
      %s196 = sphi 0, %s180
      %s208 = sphi 0, %s210
      %s211 = sphi 0, %s208
      %s212 = sphi 0, %s211
      %s228 = sphi 0, %s212
      %s240 = sphi 0, %s242
      %s243 = sphi 0, %s240
      %s244 = sphi 0, %s243
      %s260 = sphi 0, %s244
      %s272 = sphi 0, %s274
      %s275 = sphi 0, %s272
      %s276 = sphi 0, %s275
      %s292 = sphi 0, %s276
    $region4: #{tpu_custom_call.1} parent=1 // loop_header_branch
      %30 = sbr.rel (%p28) target = $region8
    $region5: #{tpu_custom_call.1} parent=1 // loop_body
      %s32 = ssub.s32 %s27, 1
      %s33 = ssub.s32 %s27, 2
      %s43 = sadd.s32 1, %s36
      %p44 = scmp.ge.s32.totalorder %s43, 2
      %s45 = scalar_select %p44, 0, %s43
      %s46 = sadd.s32 1, %s35
      %s47 = scalar_select %p44, %s46, %s35
      %p48 = scmp.ge.s32.totalorder %s47, 2
      %s49 = scalar_select %p48, 0, %s47
      %s50 = sadd.s32 1, %s34
      %s51 = scalar_select %p48, %s50, %s34
      %p52 = scmp.ge.s32.totalorder %s51, 2
      %s53 = scalar_select %p52, 0, %s51
      %s54 = smul.u32 %s35, 2
      %s55 = sadd.s32 %s54, %s36
      %s56 = smul.u32 %s49, 2
      %s57 = sadd.s32 %s56, %s45
      %s58 = ssub.s32 %s34, %s53
      %s59 = ssub.s32 %s55, %s57
      %s60 = sor.u32 %s58, %s59
      %p61 = scmp.eq.s32.totalorder %s60, 0
      %s63 = sadd.s32 %s62, 1
      %s64 = scalar_select %p61, %s62, %s63
      %p67 = pneg %p61
      %p68 = scmp.eq.s32.totalorder %s27, 7
      %p69 = por %p67, %p68
      %p70 = scmp.ne.s32.totalorder %s62, %s65
      %p71 = scmp.eq.s32.totalorder %s27, 0
      %p72 = por %p70, %p71
      %p73 = scmp.ne.s32.totalorder %s62, %s65
      %p74 = scmp.eq.s32.totalorder %s32, 7
      %p75 = por %p73, %p74
      %p76 = scmp.ne.s32.totalorder %s65, %s66
      %p77 = scmp.eq.s32.totalorder %s32, 0
      %p78 = por %p76, %p77
      %p79 = scmp.ne.s32.totalorder %s65, %s66
      %p80 = scmp.eq.s32.totalorder %s33, 7
      %p81 = por %p79, %p80
      %p83 = scmp.ne.s32.totalorder %s66, %s82
      %p84 = scmp.eq.s32.totalorder %s33, 0
      %p85 = por %p83, %p84
      %s87 = sadd.s32 %s86, 1
      %p90 = scmp.eq.s32.totalorder %s27, 7
      %p91 = scmp.ne.s32.totalorder %s86, %s88
      %p92 = scmp.eq.s32.totalorder %s27, 0
      %p93 = por %p91, %p92
      %p94 = scmp.ne.s32.totalorder %s86, %s88
      %p95 = scmp.eq.s32.totalorder %s32, 7
      %p96 = por %p94, %p95
      %p97 = scmp.ne.s32.totalorder %s88, %s89
      %p98 = scmp.eq.s32.totalorder %s32, 0
      %p99 = por %p97, %p98
      %p100 = scmp.ne.s32.totalorder %s88, %s89
      %p101 = scmp.eq.s32.totalorder %s33, 7
      %p102 = por %p100, %p101
      %p104 = scmp.ne.s32.totalorder %s89, %s103
      %p105 = scmp.eq.s32.totalorder %s33, 0
      %p106 = por %p104, %p105
      %s108 = sadd.s32 %s107, 1
      %p111 = scmp.eq.s32.totalorder %s27, 7
      %p112 = scmp.ne.s32.totalorder %s107, %s109
      %p113 = scmp.eq.s32.totalorder %s27, 0
      %p114 = por %p112, %p113
      %p115 = scmp.ne.s32.totalorder %s107, %s109
      %p116 = scmp.eq.s32.totalorder %s32, 7
      %p117 = por %p115, %p116
      %p118 = scmp.ne.s32.totalorder %s109, %s110
      %p119 = scmp.eq.s32.totalorder %s32, 0
      %p120 = por %p118, %p119
      %p121 = scmp.ne.s32.totalorder %s109, %s110
      %p122 = scmp.eq.s32.totalorder %s33, 7
      %p123 = por %p121, %p122
      %p125 = scmp.ne.s32.totalorder %s110, %s124
      %p126 = scmp.eq.s32.totalorder %s33, 0
      %p127 = por %p125, %p126
      %s129 = sadd.s32 %s128, 1
      %p132 = scmp.eq.s32.totalorder %s27, 7
      %p133 = scmp.ne.s32.totalorder %s128, %s130
      %p134 = scmp.eq.s32.totalorder %s27, 0
      %p135 = por %p133, %p134
      %p136 = scmp.ne.s32.totalorder %s128, %s130
      %p137 = scmp.eq.s32.totalorder %s32, 7
      %p138 = por %p136, %p137
      %p139 = scmp.ne.s32.totalorder %s130, %s131
      %p140 = scmp.eq.s32.totalorder %s32, 0
      %p141 = por %p139, %p140
      %p142 = scmp.ne.s32.totalorder %s130, %s131
      %p143 = scmp.eq.s32.totalorder %s33, 7
      %p144 = por %p142, %p143
      %p146 = scmp.ne.s32.totalorder %s131, %s145
      %p147 = scmp.eq.s32.totalorder %s33, 0
      %p148 = por %p146, %p147
      %s150 = sadd.s32 %s149, 1
      %p153 = scmp.eq.s32.totalorder %s27, 7
      %p154 = scmp.ne.s32.totalorder %s149, %s151
      %p155 = scmp.eq.s32.totalorder %s27, 0
      %p156 = por %p154, %p155
      %p157 = scmp.ne.s32.totalorder %s149, %s151
      %p158 = scmp.eq.s32.totalorder %s32, 7
      %p159 = por %p157, %p158
      %p160 = scmp.ne.s32.totalorder %s151, %s152
      %p161 = scmp.eq.s32.totalorder %s32, 0
      %p162 = por %p160, %p161
      %p163 = scmp.ne.s32.totalorder %s151, %s152
      %p164 = scmp.eq.s32.totalorder %s33, 7
      %p165 = por %p163, %p164
      %p167 = scmp.ne.s32.totalorder %s152, %s166
      %p168 = scmp.eq.s32.totalorder %s33, 0
      %p169 = por %p167, %p168
      %s170 = smul.u32 %s34, 2
      %s171 = sadd.s32 %s170, %s35
      %s172 = smul.u32 %s53, 2
      %s173 = sadd.s32 %s172, %s49
      %s174 = ssub.s32 %s171, %s173
      %p175 = scmp.eq.s32.totalorder %s174, 0
      %s177 = sadd.s32 %s176, 1
      %s178 = scalar_select %p175, %s176, %s177
      %p181 = pneg %p175
      %p182 = scmp.eq.s32.totalorder %s27, 7
      %p183 = por %p181, %p182
      %p184 = scmp.ne.s32.totalorder %s176, %s179
      %p185 = scmp.eq.s32.totalorder %s27, 0
      %p186 = por %p184, %p185
      %p187 = scmp.ne.s32.totalorder %s176, %s179
      %p188 = scmp.eq.s32.totalorder %s32, 7
      %p189 = por %p187, %p188
      %p190 = scmp.ne.s32.totalorder %s179, %s180
      %p191 = scmp.eq.s32.totalorder %s32, 0
      %p192 = por %p190, %p191
      %p193 = scmp.ne.s32.totalorder %s179, %s180
      %p194 = scmp.eq.s32.totalorder %s33, 7
      %p195 = por %p193, %p194
      %p197 = scmp.ne.s32.totalorder %s180, %s196
      %p198 = scmp.eq.s32.totalorder %s33, 0
      %p199 = por %p197, %p198
      %s200 = smul.u32 %s35, 2
      %s201 = sadd.s32 %s200, %s36
      %s202 = smul.u32 %s49, 2
      %s203 = sadd.s32 %s202, %s45
      %s204 = ssub.s32 %s34, %s53
      %s205 = ssub.s32 %s201, %s203
      %s206 = sor.u32 %s204, %s205
      %p207 = scmp.eq.s32.totalorder %s206, 0
      %s209 = sadd.s32 %s208, 1
      %s210 = scalar_select %p207, %s208, %s209
      %p213 = pneg %p207
      %p214 = scmp.eq.s32.totalorder %s27, 7
      %p215 = por %p213, %p214
      %p216 = scmp.ne.s32.totalorder %s208, %s211
      %p217 = scmp.eq.s32.totalorder %s27, 0
      %p218 = por %p216, %p217
      %p219 = scmp.ne.s32.totalorder %s208, %s211
      %p220 = scmp.eq.s32.totalorder %s32, 7
      %p221 = por %p219, %p220
      %p222 = scmp.ne.s32.totalorder %s211, %s212
      %p223 = scmp.eq.s32.totalorder %s32, 0
      %p224 = por %p222, %p223
      %p225 = scmp.ne.s32.totalorder %s211, %s212
      %p226 = scmp.eq.s32.totalorder %s33, 7
      %p227 = por %p225, %p226
      %p229 = scmp.ne.s32.totalorder %s212, %s228
      %p230 = scmp.eq.s32.totalorder %s33, 0
      %p231 = por %p229, %p230
      %s232 = smul.u32 %s35, 2
      %s233 = sadd.s32 %s232, %s36
      %s234 = smul.u32 %s49, 2
      %s235 = sadd.s32 %s234, %s45
      %s236 = ssub.s32 %s34, %s53
      %s237 = ssub.s32 %s233, %s235
      %s238 = sor.u32 %s236, %s237
      %p239 = scmp.eq.s32.totalorder %s238, 0
      %s241 = sadd.s32 %s240, 1
      %s242 = scalar_select %p239, %s240, %s241
      %p245 = pneg %p239
      %p246 = scmp.eq.s32.totalorder %s27, 7
      %p247 = por %p245, %p246
      %p248 = scmp.ne.s32.totalorder %s240, %s243
      %p249 = scmp.eq.s32.totalorder %s27, 0
      %p250 = por %p248, %p249
      %p251 = scmp.ne.s32.totalorder %s240, %s243
      %p252 = scmp.eq.s32.totalorder %s32, 7
      %p253 = por %p251, %p252
      %p254 = scmp.ne.s32.totalorder %s243, %s244
      %p255 = scmp.eq.s32.totalorder %s32, 0
      %p256 = por %p254, %p255
      %p257 = scmp.ne.s32.totalorder %s243, %s244
      %p258 = scmp.eq.s32.totalorder %s33, 7
      %p259 = por %p257, %p258
      %p261 = scmp.ne.s32.totalorder %s244, %s260
      %p262 = scmp.eq.s32.totalorder %s33, 0
      %p263 = por %p261, %p262
      %s264 = smul.u32 %s35, 2
      %s265 = sadd.s32 %s264, %s36
      %s266 = smul.u32 %s49, 2
      %s267 = sadd.s32 %s266, %s45
      %s268 = ssub.s32 %s34, %s53
      %s269 = ssub.s32 %s265, %s267
      %s270 = sor.u32 %s268, %s269
      %p271 = scmp.eq.s32.totalorder %s270, 0
      %s273 = sadd.s32 %s272, 1
      %s274 = scalar_select %p271, %s272, %s273
      %p277 = pneg %p271
      %p278 = scmp.eq.s32.totalorder %s27, 7
      %p279 = por %p277, %p278
      %p280 = scmp.ne.s32.totalorder %s272, %s275
      %p281 = scmp.eq.s32.totalorder %s27, 0
      %p282 = por %p280, %p281
      %p283 = scmp.ne.s32.totalorder %s272, %s275
      %p284 = scmp.eq.s32.totalorder %s32, 7
      %p285 = por %p283, %p284
      %p286 = scmp.ne.s32.totalorder %s275, %s276
      %p287 = scmp.eq.s32.totalorder %s32, 0
      %p288 = por %p286, %p287
      %p289 = scmp.ne.s32.totalorder %s275, %s276
      %p290 = scmp.eq.s32.totalorder %s33, 7
      %p291 = por %p289, %p290
      %p293 = scmp.ne.s32.totalorder %s276, %s292
      %p294 = scmp.eq.s32.totalorder %s33, 0
      %p295 = por %p293, %p294
      %p296 = scmp.le.s32.totalorder 1, %s27
      %p297 = scmp.lt.s32.totalorder %s27, 9
      %p298 = pnand %p296, %p297
      %p299 = pneg %p298
      // Predicated region
      $region9: #{tpu_custom_call.1} parent=5 // pred_check
        _
      $region10: #{tpu_custom_call.1} parent=5 // pred_check_branch
        %301 = sbr.rel (%p298) target = $region12
      $region11: #{tpu_custom_call.1} parent=5 // pred_region
        %s302 = ssub.s32 %s27, 1
        // Predicated region
        $region13: #{tpu_custom_call.1} parent=11 // pred_check
          %p303 = pneg %p99
        $region14: #{tpu_custom_call.1} parent=11 // pred_check_branch
          %305 = sbr.rel (%p303) target = $region16
        $region15: #{tpu_custom_call.1} parent=11 // pred_region
          %s307 = ssub.s32 2048, 2048
          %308 = vsyncadd [#allocation7], %s307
          %s309 = sshll.u32 [#allocation6], 4
          %s310 = int_to_ptr.vmem [resolvable:$true] %s309
          %315 = dma.hbm_to_vmem [thread:$0]  %s1, 2048, %s310, [#allocation7], 64, 64, 4
        $region16: #{tpu_custom_call.1} parent=11 // pred_fallthru
          _
        // Predicated region
        $region17: #{tpu_custom_call.1} parent=11 // pred_check
          %p316 = pneg %p120
        $region18: #{tpu_custom_call.1} parent=11 // pred_check_branch
          %318 = sbr.rel (%p316) target = $region20
        $region19: #{tpu_custom_call.1} parent=11 // pred_region
          _
        $region20: #{tpu_custom_call.1} parent=11 // pred_fallthru
          _
        // Predicated region
        $region21: #{tpu_custom_call.1} parent=11 // pred_check
          %p319 = pneg %p141
        $region22: #{tpu_custom_call.1} parent=11 // pred_check_branch
          %321 = sbr.rel (%p319) target = $region24
        $region23: #{tpu_custom_call.1} parent=11 // pred_region
          _
        $region24: #{tpu_custom_call.1} parent=11 // pred_fallthru
          _
        // Predicated region
        $region25: #{tpu_custom_call.1} parent=11 // pred_check
          %p322 = pneg %p162
        $region26: #{tpu_custom_call.1} parent=11 // pred_check_branch
          %324 = sbr.rel (%p322) target = $region28
        $region27: #{tpu_custom_call.1} parent=11 // pred_region
          _
        $region28: #{tpu_custom_call.1} parent=11 // pred_fallthru
          _
      $region12: #{tpu_custom_call.1} parent=5 // pred_fallthru
        _
      %p325 = scmp.lt.s32.totalorder %s27, 8
      // Predicated region
      $region29: #{tpu_custom_call.1} parent=5 // pred_check
        %p326 = pneg %p325
      $region30: #{tpu_custom_call.1} parent=5 // pred_check_branch
        %328 = sbr.rel (%p326) target = $region32
      $region31: #{tpu_custom_call.1} parent=5 // pred_region
        // Predicated region
        $region33: #{tpu_custom_call.1} parent=31 // pred_check
          %p329 = pneg %p72
        $region34: #{tpu_custom_call.1} parent=31 // pred_check_branch
          %331 = sbr.rel (%p329) target = $region36
        $region35: #{tpu_custom_call.1} parent=31 // pred_region
          %s332 = sand.u32 %s62, 1
          %s333 = scalar_lea.sflag [#allocation4], %s332
          %s334 = sand.u32 %s62, 1
          %s335 = smul.addr %s334, 64
          %s336 = scalar_lea.vmem [#allocation3], %s335
          %s337 = smul.u32 %s35, 2
          %s338 = sadd.s32 %s337, %s36
          %s339 = smul.u32 8, %s338
          %s341 = ssub.s32 1024, 1024
          %342 = vsyncadd %s333, %s341
          %s343 = smul.addr %s339, 2
          %s344 = smul.addr %s34, 64
          %s345 = sadd.s32 %s343, %s344
          %s346 = smul.addr %s345, 64
          %s347 = scalar_lea.hbm %s0, %s346
          %s348 = sshll.u32 %s336, 4
          %s349 = int_to_ptr.vmem [resolvable:$true] %s348
          %354 = dma.hbm_to_vmem [thread:$0]  %s347, 1024, %s349, %s333, 128, 128, 8
        $region36: #{tpu_custom_call.1} parent=31 // pred_fallthru
          _
      $region32: #{tpu_custom_call.1} parent=5 // pred_fallthru
        _
      %p355 = scmp.le.s32.totalorder 1, %s27
      %p356 = scmp.lt.s32.totalorder %s27, 9
      %p357 = pnand %p355, %p356
      %p358 = pneg %p357
      // Predicated region
      $region37: #{tpu_custom_call.1} parent=5 // pred_check
        _
      $region38: #{tpu_custom_call.1} parent=5 // pred_check_branch
        %360 = sbr.rel (%p357) target = $region40
      $region39: #{tpu_custom_call.1} parent=5 // pred_region
        %s361 = ssub.s32 %s27, 1
        %s362 = sand.u32 %s65, 1
        %s363 = scalar_lea.sflag [#allocation4], %s362
        %s364 = sand.u32 %s65, 1
        %s365 = smul.addr %s364, 64
        %s366 = scalar_lea.vmem [#allocation3], %s365
        // Predicated region
        $region41: #{tpu_custom_call.1} parent=39 // pred_check
          %p367 = pneg %p78
        $region42: #{tpu_custom_call.1} parent=39 // pred_check_branch
          %369 = sbr.rel (%p367) target = $region44
        $region43: #{tpu_custom_call.1} parent=39 // pred_region
          %370 = dma.done %s363, 1024
        $region44: #{tpu_custom_call.1} parent=39 // pred_fallthru
          _
        // Predicated region
        $region45: #{tpu_custom_call.1} parent=39 // pred_check
          %p371 = pneg %p99
        $region46: #{tpu_custom_call.1} parent=39 // pred_check_branch
          %373 = sbr.rel (%p371) target = $region48
        $region47: #{tpu_custom_call.1} parent=39 // pred_region
          %374 = dma.done [#allocation7], 2048
        $region48: #{tpu_custom_call.1} parent=39 // pred_fallthru
          _
        %s375 = sand.u32 %s65, 1
        %s376 = scalar_lea.sflag [#allocation4], %s375
        %s377 = sand.u32 %s65, 1
        %s378 = smul.addr %s377, 64
        %s379 = scalar_lea.vmem [#allocation3], %s378
        %p380 = pneg %p78
        %p381 = pneg %p75
        %p382 = pneg %p99
        %p383 = pneg %p96
        %p384 = pneg %p120
        %p385 = pneg %p117
        %p386 = pneg %p141
        %p387 = pneg %p138
        %p388 = pneg %p162
        %p389 = pneg %p159
        %p390 = pneg %p192
        %p391 = pneg %p189
        %s392 = sand.u32 %s179, 1
        %s393 = scalar_lea.sflag [#allocation5], %s392
        %s394 = sand.u32 %s179, 1
        %s395 = smul.addr %s394, 2
        %s396 = scalar_lea.vmem [#allocation8], %s395
        %p397 = pneg %p224
        %p398 = pneg %p221
        %s399 = sand.u32 %s32, 1
        %s400 = scalar_lea.sflag [#allocation10], %s399
        %s401 = sand.u32 %s211, 1
        %s402 = smul.addr %s401, 32
        %s403 = scalar_lea.vmem [#allocation9], %s402
        %p404 = pneg %p256
        %p405 = pneg %p253
        %s406 = smul.u32 %s38, 2
        %s407 = sadd.s32 %s406, %s39
        %s408 = smul.u32 8, %s407
        %p409 = scmp.lt.s32.totalorder %s37, 1
        %s410 = scalar_select %p409, %s37, 1
        %p411 = scmp.lt.s32.totalorder %s408, 31
        %s412 = scalar_select %p411, %s408, 31
        %s413 = smul.addr %s410, 32
        %s414 = sadd.s32 %s412, %s413
        %s415 = smul.addr %s414, 8
        %s416 = scalar_lea.vmem %s7, %s415
        %p417 = pneg %p288
        %p418 = pneg %p285
        %s419 = sand.u32 %s32, 1
        %s420 = scalar_lea.sflag [#allocation10], %s419
        %s421 = sand.u32 %s275, 1
        %s422 = smul.addr %s421, 32
        %s423 = scalar_lea.vmem [#allocation11], %s422
        %s424 = smul.u32 %s38, 2
        %s425 = sadd.s32 %s424, %s39
        %s426 = smul.u32 8, %s425
        %s427 = smul.u32 %s37, 2
        %s428 = sadd.s32 %s427, %s38
        %s429 = smul.u32 %s38, 2
        %s430 = sadd.s32 %s429, %s39
        %s431 = smul.u32 8, %s430
        %s432 = smul.u32 %s38, 2
        %s433 = sadd.s32 %s432, %s39
        %s434 = smul.u32 8, %s433
        %p435 = scmp.lt.s32.totalorder %s37, 1
        %s436 = scalar_select %p435, %s37, 1
        %p437 = scmp.lt.s32.totalorder %s434, 31
        %s438 = scalar_select %p437, %s434, 31
        %s439 = smul.addr %s436, 32
        %s440 = sadd.s32 %s438, %s439
        %s441 = smul.addr %s440, 8
        %s442 = scalar_lea.vmem %s7, %s441
        %s443 = smul.u32 %s38, 2
        %s444 = sadd.s32 %s443, %s39
        %s445 = smul.u32 8, %s444
        %s446 = smul.u32 %s38, 2
        %s447 = sadd.s32 %s446, %s39
        %s448 = smul.u32 8, %s447
        %v450 = vld [vmem:[%s366] sm:$0xff]
        %v451 = vld [vmem:[%s366 + $0x8] sm:$0xff]
        %v452 = vld [vmem:[%s366 + $0x10] sm:$0xff]
        %v453 = vld [vmem:[%s366 + $0x18] sm:$0xff]
        %v454 = vld [vmem:[%s366 + $0x20] sm:$0xff]
        %v455 = vld [vmem:[%s366 + $0x28] sm:$0xff]
        %v456 = vld [vmem:[%s366 + $0x30] sm:$0xff]
        %v457 = vld [vmem:[%s366 + $0x38] sm:$0xff]
        %v458 = vunpack.c.l.bf16 %v450
        %v459 = vunpack.c.h.bf16 %v450
        %v460 = vunpack.c.l.bf16 %v451
        %v461 = vunpack.c.h.bf16 %v451
        %v462 = vunpack.c.l.bf16 %v452
        %v463 = vunpack.c.h.bf16 %v452
        %v464 = vunpack.c.l.bf16 %v453
        %v465 = vunpack.c.h.bf16 %v453
        %v466 = vunpack.c.l.bf16 %v454
        %v467 = vunpack.c.h.bf16 %v454
        %v468 = vunpack.c.l.bf16 %v455
        %v469 = vunpack.c.h.bf16 %v455
        %v470 = vunpack.c.l.bf16 %v456
        %v471 = vunpack.c.h.bf16 %v456
        %v472 = vunpack.c.l.bf16 %v457
        %v473 = vunpack.c.h.bf16 %v457
        %v474 = vmax.f32 %v458, 1e-06
        %v475 = vmax.f32 %v459, 1e-06
        %v476 = vmax.f32 %v460, 1e-06
        %v477 = vmax.f32 %v461, 1e-06
        %v478 = vmax.f32 %v462, 1e-06
        %v479 = vmax.f32 %v463, 1e-06
        %v480 = vmax.f32 %v464, 1e-06
        %v481 = vmax.f32 %v465, 1e-06
        %v482 = vmax.f32 %v466, 1e-06
        %v483 = vmax.f32 %v467, 1e-06
        %v484 = vmax.f32 %v468, 1e-06
        %v485 = vmax.f32 %v469, 1e-06
        %v486 = vmax.f32 %v470, 1e-06
        %v487 = vmax.f32 %v471, 1e-06
        %v488 = vmax.f32 %v472, 1e-06
        %v489 = vmax.f32 %v473, 1e-06
        %v490 = vmul.f32 %v474, %v474
        %v491 = vmul.f32 %v475, %v475
        %v492 = vmul.f32 %v476, %v476
        %v493 = vmul.f32 %v477, %v477
        %v494 = vmul.f32 %v478, %v478
        %v495 = vmul.f32 %v479, %v479
        %v496 = vmul.f32 %v480, %v480
        %v497 = vmul.f32 %v481, %v481
        %v498 = vmul.f32 %v482, %v482
        %v499 = vmul.f32 %v483, %v483
        %v500 = vmul.f32 %v484, %v484
        %v501 = vmul.f32 %v485, %v485
        %v502 = vmul.f32 %v486, %v486
        %v503 = vmul.f32 %v487, %v487
        %v504 = vmul.f32 %v488, %v488
        %v505 = vmul.f32 %v489, %v489
        %v506 = vmul.f32 %v490, %v474
        %v507 = vmul.f32 %v491, %v475
        %v508 = vmul.f32 %v492, %v476
        %v509 = vmul.f32 %v493, %v477
        %v510 = vmul.f32 %v494, %v478
        %v511 = vmul.f32 %v495, %v479
        %v512 = vmul.f32 %v496, %v480
        %v513 = vmul.f32 %v497, %v481
        %v514 = vmul.f32 %v498, %v482
        %v515 = vmul.f32 %v499, %v483
        %v516 = vmul.f32 %v500, %v484
        %v517 = vmul.f32 %v501, %v485
        %v518 = vmul.f32 %v502, %v486
        %v519 = vmul.f32 %v503, %v487
        %v520 = vmul.f32 %v504, %v488
        %v521 = vmul.f32 %v505, %v489
        %v522 = vadd.f32 %v506, %v508
        %v523 = vadd.f32 %v522, %v510
        %v524 = vadd.f32 %v523, %v512
        %v525 = vadd.f32 %v524, %v514
        %v526 = vadd.f32 %v525, %v516
        %v527 = vadd.f32 %v526, %v518
        %v528 = vadd.f32 %v527, %v520
        %v529 = vrot.slane %v528, 4
        %v530 = vadd.f32 %v528, %v529
        %v531 = vrot.slane %v530, 2
        %v532 = vadd.f32 %v530, %v531
        %v533 = vrot.slane %v532, 1
        %v534 = vadd.f32 %v532, %v533
        %v535 = vadd.f32 %v507, %v509
        %v536 = vadd.f32 %v535, %v511
        %v537 = vadd.f32 %v536, %v513
        %v538 = vadd.f32 %v537, %v515
        %v539 = vadd.f32 %v538, %v517
        %v540 = vadd.f32 %v539, %v519
        %v541 = vadd.f32 %v540, %v521
        %v542 = vrot.slane %v541, 4
        %v543 = vadd.f32 %v541, %v542
        %v544 = vrot.slane %v543, 2
        %v545 = vadd.f32 %v543, %v544
        %v546 = vrot.slane %v545, 1
        %v547 = vadd.f32 %v545, %v546
        %p548 = scmp.eq.s32.totalorder %s39, 0
        // Predicated region
        $region49: #{tpu_custom_call.1} parent=39 // pred_check
          %p549 = pneg %p548
        $region50: #{tpu_custom_call.1} parent=39 // pred_check_branch
          %551 = sbr.rel (%p549) target = $region52
        $region51: #{tpu_custom_call.1} parent=39 // pred_region
          %v552 = vlaneseq
          %vm553 = vcmp.ge.s32.totalorder %v552, 0
          %vm554 = vcmp.lt.s32.totalorder %v552, 256
          %vm555 = vmand %vm553, %vm554
          %556 = vst.msk [vmem:[%s396] sm:$0x3] %vm555, 0.0
        $region52: #{tpu_custom_call.1} parent=39 // pred_fallthru
          _
        %v557 = vld [vmem:[%s396] sm:$0x3]
        %v560 = vcombine.low %v534, %v547
        %v562 = vunpack.c.l.s4 1966171168
        %v563 = vunpack.c.0.s8 %v562
        %v564 = vlaneseq
        %v565 = vshrl.u32 %v564, 7
        %v566 = vsub.s32 %v563, %v565
        %v567 = vrot.slane %v560, %v566
        %v569 = vunpack.c.l.s4 1966171168
        %v570 = vunpack.c.0.s8 %v569
        %v571 = vlaneseq
        %v572 = vshrl.u32 %v571, 7
        %v573 = vsub.s32 %v570, %v572
        %v574 = vrot.slane %v567, %v573
        %v576 = vadd.f32 %v557, %v574
        %v577 = vlaneseq
        %vm578 = vcmp.ge.s32.totalorder %v577, 0
        %vm579 = vcmp.lt.s32.totalorder %v577, 256
        %vm580 = vmand %vm578, %vm579
        %581 = vst.msk [vmem:[%s396] sm:$0x3] %vm580, %v576
        %v582 = vld [vmem:[%s3] sm:$0x3]
        %v584 = vlaneseq
        %v585 = vshrl.u32 %v584, 7
        %v586 = vsub.s32 0, %v585
        %v587 = vrot.slane %v582, %v586
        %v588 = vlaneseq
        %v589 = vshrl.u32 %v588, 7
        %v590 = vsub.s32 1, %v589
        %v591 = vrot.slane %v582, %v590
        %v594 = vmul.f32 %v458, %v587
        %v595 = vmul.f32 %v459, %v591
        %v596 = vmul.f32 %v460, %v587
        %v597 = vmul.f32 %v461, %v591
        %v598 = vmul.f32 %v462, %v587
        %v599 = vmul.f32 %v463, %v591
        %v600 = vmul.f32 %v464, %v587
        %v601 = vmul.f32 %v465, %v591
        %v602 = vmul.f32 %v466, %v587
        %v603 = vmul.f32 %v467, %v591
        %v604 = vmul.f32 %v468, %v587
        %v605 = vmul.f32 %v469, %v591
        %v606 = vmul.f32 %v470, %v587
        %v607 = vmul.f32 %v471, %v591
        %v608 = vmul.f32 %v472, %v587
        %v609 = vmul.f32 %v473, %v591
        %v610 = vadd.f32 %v594, %v595
        %611 = vadd.xlane.f32.xlu0 %v610
        %v612 = vpop.xlane.xlu0 %611
        %v613 = vadd.f32 %v596, %v597
        %614 = vadd.xlane.f32.xlu0 %v613
        %v615 = vpop.xlane.xlu0 %614
        %v616 = vadd.f32 %v598, %v599
        %617 = vadd.xlane.f32.xlu0 %v616
        %v618 = vpop.xlane.xlu0 %617
        %v619 = vadd.f32 %v600, %v601
        %620 = vadd.xlane.f32.xlu0 %v619
        %v621 = vpop.xlane.xlu0 %620
        %v622 = vadd.f32 %v602, %v603
        %623 = vadd.xlane.f32.xlu0 %v622
        %v624 = vpop.xlane.xlu0 %623
        %v625 = vadd.f32 %v604, %v605
        %626 = vadd.xlane.f32.xlu0 %v625
        %v627 = vpop.xlane.xlu0 %626
        %v628 = vadd.f32 %v606, %v607
        %629 = vadd.xlane.f32.xlu0 %v628
        %v630 = vpop.xlane.xlu0 %629
        %v631 = vadd.f32 %v608, %v609
        %632 = vadd.xlane.f32.xlu0 %v631
        %v633 = vpop.xlane.xlu0 %632
        %v634 = vld [vmem:[#allocation2] sm:$0x1]
        %v636 = vlaneseq
        %v637 = vshrl.u32 %v636, 7
        %v638 = vsub.s32 0, %v637
        %v639 = vrot.slane %v634, %v638
        %v641 = vadd.f32 %v612, %v639
        %v642 = vadd.f32 %v615, %v639
        %v643 = vadd.f32 %v618, %v639
        %v644 = vadd.f32 %v621, %v639
        %v645 = vadd.f32 %v624, %v639
        %v646 = vadd.f32 %v627, %v639
        %v647 = vadd.f32 %v630, %v639
        %v648 = vadd.f32 %v633, %v639
        %v649 = vxor.u32 %v641, 2147483648
        %v650 = vxor.u32 %v642, 2147483648
        %v651 = vxor.u32 %v643, 2147483648
        %v652 = vxor.u32 %v644, 2147483648
        %v653 = vxor.u32 %v645, 2147483648
        %v654 = vxor.u32 %v646, 2147483648
        %v655 = vxor.u32 %v647, 2147483648
        %v656 = vxor.u32 %v648, 2147483648
        %v657 = vmul.f32 %v649, 1.442695
        %v658 = vpow.pop %v657
        %v659 = vmul.f32 %v650, 1.442695
        %v660 = vpow.pop %v659
        %v661 = vmul.f32 %v651, 1.442695
        %v662 = vpow.pop %v661
        %v663 = vmul.f32 %v652, 1.442695
        %v664 = vpow.pop %v663
        %v665 = vmul.f32 %v653, 1.442695
        %v666 = vpow.pop %v665
        %v667 = vmul.f32 %v654, 1.442695
        %v668 = vpow.pop %v667
        %v669 = vmul.f32 %v655, 1.442695
        %v670 = vpow.pop %v669
        %v671 = vmul.f32 %v656, 1.442695
        %v672 = vpow.pop %v671
        %v673 = vadd.f32 %v658, 1.0
        %v674 = vadd.f32 %v660, 1.0
        %v675 = vadd.f32 %v662, 1.0
        %v676 = vadd.f32 %v664, 1.0
        %v677 = vadd.f32 %v666, 1.0
        %v678 = vadd.f32 %v668, 1.0
        %v679 = vadd.f32 %v670, 1.0
        %v680 = vadd.f32 %v672, 1.0
        %v681 = vrcp.pop %v673
        %v682 = vmul.f32 1.0, %v681
        %v683 = vrcp.pop %v674
        %v684 = vmul.f32 1.0, %v683
        %v685 = vrcp.pop %v675
        %v686 = vmul.f32 1.0, %v685
        %v687 = vrcp.pop %v676
        %v688 = vmul.f32 1.0, %v687
        %v689 = vrcp.pop %v677
        %v690 = vmul.f32 1.0, %v689
        %v691 = vrcp.pop %v678
        %v692 = vmul.f32 1.0, %v691
        %v693 = vrcp.pop %v679
        %v694 = vmul.f32 1.0, %v693
        %v695 = vrcp.pop %v680
        %v696 = vmul.f32 1.0, %v695
        %v697 = vld [vmem:[#allocation6] sm:$0xf]
        %v698 = vld [vmem:[#allocation6 + $0x4] sm:$0xf]
        %v699 = vld [vmem:[#allocation6 + $0x8] sm:$0xf]
        %v700 = vld [vmem:[#allocation6 + $0xc] sm:$0xf]
        %v701 = vld [vmem:[#allocation6 + $0x10] sm:$0xf]
        %v702 = vld [vmem:[#allocation6 + $0x14] sm:$0xf]
        %v703 = vld [vmem:[#allocation6 + $0x18] sm:$0xf]
        %v704 = vld [vmem:[#allocation6 + $0x1c] sm:$0xf]
        %v705 = vld [vmem:[#allocation6 + $0x20] sm:$0xf]
        %v706 = vld [vmem:[#allocation6 + $0x24] sm:$0xf]
        %v707 = vld [vmem:[#allocation6 + $0x28] sm:$0xf]
        %v708 = vld [vmem:[#allocation6 + $0x2c] sm:$0xf]
        %v709 = vld [vmem:[#allocation6 + $0x30] sm:$0xf]
        %v710 = vld [vmem:[#allocation6 + $0x34] sm:$0xf]
        %v711 = vld [vmem:[#allocation6 + $0x38] sm:$0xf]
        %v712 = vld [vmem:[#allocation6 + $0x3c] sm:$0xf]
        %v713 = vld [vmem:[#allocation6 + $0x40] sm:$0xf]
        %v714 = vld [vmem:[#allocation6 + $0x44] sm:$0xf]
        %v715 = vld [vmem:[#allocation6 + $0x48] sm:$0xf]
        %v716 = vld [vmem:[#allocation6 + $0x4c] sm:$0xf]
        %v717 = vld [vmem:[#allocation6 + $0x50] sm:$0xf]
        %v718 = vld [vmem:[#allocation6 + $0x54] sm:$0xf]
        %v719 = vld [vmem:[#allocation6 + $0x58] sm:$0xf]
        %v720 = vld [vmem:[#allocation6 + $0x5c] sm:$0xf]
        %v721 = vld [vmem:[#allocation6 + $0x60] sm:$0xf]
        %v722 = vld [vmem:[#allocation6 + $0x64] sm:$0xf]
        %v723 = vld [vmem:[#allocation6 + $0x68] sm:$0xf]
        %v724 = vld [vmem:[#allocation6 + $0x6c] sm:$0xf]
        %v725 = vld [vmem:[#allocation6 + $0x70] sm:$0xf]
        %v726 = vld [vmem:[#allocation6 + $0x74] sm:$0xf]
        %v727 = vld [vmem:[#allocation6 + $0x78] sm:$0xf]
        %v728 = vld [vmem:[#allocation6 + $0x7c] sm:$0xf]
        %v729 = vld [vmem:[%s2] sm:$0x1]
        %v731 = vlaneseq
        %v732 = vshrl.u32 %v731, 7
        %v733 = vsub.s32 0, %v732
        %v734 = vrot.slane %v729, %v733
        %v744 = vunpack.c.l.b16 %v450
        %v745 = vunpack.c.h.b16 %v450
        %v746 = vunpack.c.l.b16 %v451
        %v747 = vunpack.c.h.b16 %v451
        %v748 = vunpack.c.l.b16 %v452
        %v749 = vunpack.c.h.b16 %v452
        %v750 = vunpack.c.l.b16 %v453
        %v751 = vunpack.c.h.b16 %v453
        %v752 = vunpack.c.l.b16 %v454
        %v753 = vunpack.c.h.b16 %v454
        %v754 = vunpack.c.l.b16 %v455
        %v755 = vunpack.c.h.b16 %v455
        %v756 = vunpack.c.l.b16 %v456
        %v757 = vunpack.c.h.b16 %v456
        %v758 = vunpack.c.l.b16 %v457
        %v759 = vunpack.c.h.b16 %v457
        %v760 = vpack.c.b16 %v746, %v744
        %v761 = vpack.c.b16 %v747, %v745
        %v762 = vpack.c.b16 %v750, %v748
        %v763 = vpack.c.b16 %v751, %v749
        %v764 = vpack.c.b16 %v754, %v752
        %v765 = vpack.c.b16 %v755, %v753
        %v766 = vpack.c.b16 %v758, %v756
        %v767 = vpack.c.b16 %v759, %v757
        %v808 = vunpack.c.l.b16 %v697
        %v809 = vunpack.c.l.b16 %v698
        %v810 = vunpack.c.l.b16 %v699
        %v811 = vunpack.c.l.b16 %v700
        %v812 = vunpack.c.l.b16 %v701
        %v813 = vunpack.c.l.b16 %v702
        %v814 = vunpack.c.l.b16 %v703
        %v815 = vunpack.c.l.b16 %v704
        %v816 = vunpack.c.l.b16 %v705
        %v817 = vunpack.c.l.b16 %v706
        %v818 = vunpack.c.l.b16 %v707
        %v819 = vunpack.c.l.b16 %v708
        %v820 = vunpack.c.l.b16 %v709
        %v821 = vunpack.c.l.b16 %v710
        %v822 = vunpack.c.l.b16 %v711
        %v823 = vunpack.c.l.b16 %v712
        %v824 = vunpack.c.l.b16 %v713
        %v825 = vunpack.c.l.b16 %v714
        %v826 = vunpack.c.l.b16 %v715
        %v827 = vunpack.c.l.b16 %v716
        %v828 = vunpack.c.l.b16 %v717
        %v829 = vunpack.c.l.b16 %v718
        %v830 = vunpack.c.l.b16 %v719
        %v831 = vunpack.c.l.b16 %v720
        %v832 = vunpack.c.l.b16 %v721
        %v833 = vunpack.c.l.b16 %v722
        %v834 = vunpack.c.l.b16 %v723
        %v835 = vunpack.c.l.b16 %v724
        %v836 = vunpack.c.l.b16 %v725
        %v837 = vunpack.c.l.b16 %v726
        %v838 = vunpack.c.l.b16 %v727
        %v839 = vunpack.c.l.b16 %v728
        %v840 = vpack.c.b16 %v809, %v808
        %v841 = vpack.c.b16 %v811, %v810
        %v842 = vpack.c.b16 %v813, %v812
        %v843 = vpack.c.b16 %v815, %v814
        %v844 = vpack.c.b16 %v817, %v816
        %v845 = vpack.c.b16 %v819, %v818
        %v846 = vpack.c.b16 %v821, %v820
        %v847 = vpack.c.b16 %v823, %v822
        %v848 = vpack.c.b16 %v825, %v824
        %v849 = vpack.c.b16 %v827, %v826
        %v850 = vpack.c.b16 %v829, %v828
        %v851 = vpack.c.b16 %v831, %v830
        %v852 = vpack.c.b16 %v833, %v832
        %v853 = vpack.c.b16 %v835, %v834
        %v854 = vpack.c.b16 %v837, %v836
        %v855 = vpack.c.b16 %v839, %v838
        %872 = vmatprep.subr.bf16.mxu0 0
        %873 = vmatpush1.bf16.msra.mxu0 %v840
        %874 = vmatprep.subr.bf16.mxu0 0
        %875 = vmatpush1.bf16.msra.mxu0 %v841
        %876 = vmatprep.subr.bf16.mxu0 0
        %877 = vmatpush1.bf16.msra.mxu0 %v842
        %878 = vmatprep.subr.bf16.mxu0 0
        %879 = vmatpush1.bf16.msra.mxu0 %v843
        %880 = vmatprep.subr.bf16.mxu0 0
        %881 = vmatpush1.bf16.msra.mxu0 %v844
        %882 = vmatprep.subr.bf16.mxu0 0
        %883 = vmatpush1.bf16.msra.mxu0 %v845
        %884 = vmatprep.subr.bf16.mxu0 0
        %885 = vmatpush1.bf16.msra.mxu0 %v846
        %886 = vmatprep.subr.bf16.mxu0 0
        %887 = vmatpush1.bf16.msra.mxu0 %v847
        %888 = vmatprep.subr.bf16.mxu0 0
        %889 = vmatpush1.bf16.msra.mxu0 %v848
        %890 = vmatprep.subr.bf16.mxu0 0
        %891 = vmatpush1.bf16.msra.mxu0 %v849
        %892 = vmatprep.subr.bf16.mxu0 0
        %893 = vmatpush1.bf16.msra.mxu0 %v850
        %894 = vmatprep.subr.bf16.mxu0 0
        %895 = vmatpush1.bf16.msra.mxu0 %v851
        %896 = vmatprep.subr.bf16.mxu0 0
        %897 = vmatpush1.bf16.msra.mxu0 %v852
        %898 = vmatprep.subr.bf16.mxu0 0
        %899 = vmatpush1.bf16.msra.mxu0 %v853
        %900 = vmatprep.subr.bf16.mxu0 0
        %901 = vmatpush1.bf16.msra.mxu0 %v854
        %902 = vmatprep.subr.bf16.mxu0 0
        %903 = vmatpush1.bf16.msra.mxu0 %v855
        %904 = vmatprep.mubr.bf16.mxu0 %v761
        %905 = vmatmul.mubr.bf16.gmra.mrb[0].mxu0 %v760
        %v906 = vpop.f32.mrb[0].mxu0
        %v907 = vadd.f32 %v734, %v906
        %v908 = vpop.f32.mrb[0].mxu0
        %v909 = vpop.f32.mrb[0].mxu0
        %v910 = vadd.f32 %v734, %v909
        %v911 = vpop.f32.mrb[0].mxu0
        %912 = vmatprep.mubr.bf16.mxu0 %v763
        %913 = vmatmul.mubr.bf16.gmra.mrb[0].mxu0 %v762
        %v914 = vpop.f32.mrb[0].mxu0
        %v915 = vadd.f32 %v734, %v914
        %v916 = vpop.f32.mrb[0].mxu0
        %v917 = vpop.f32.mrb[0].mxu0
        %v918 = vadd.f32 %v734, %v917
        %v919 = vpop.f32.mrb[0].mxu0
        %920 = vmatprep.mubr.bf16.mxu0 %v765
        %921 = vmatmul.mubr.bf16.gmra.mrb[0].mxu0 %v764
        %v922 = vpop.f32.mrb[0].mxu0
        %v923 = vadd.f32 %v734, %v922
        %v924 = vpop.f32.mrb[0].mxu0
        %v925 = vpop.f32.mrb[0].mxu0
        %v926 = vadd.f32 %v734, %v925
        %v927 = vpop.f32.mrb[0].mxu0
        %928 = vmatprep.mubr.bf16.mxu0 %v767
        %929 = vmatmul.mubr.bf16.gmra.mrb[0].mxu0 %v766
        %v930 = vpop.f32.mrb[0].mxu0
        %v931 = vadd.f32 %v734, %v930
        %v932 = vpop.f32.mrb[0].mxu0
        %v933 = vpop.f32.mrb[0].mxu0
        %v934 = vadd.f32 %v734, %v933
        %v935 = vpop.f32.mrb[0].mxu0
        %936 = vdwg.mxu0
        %v937 = vpack.c.bf16 %v910, %v907
        %v938 = vpack.c.bf16 %v918, %v915
        %v939 = vpack.c.bf16 %v926, %v923
        %v940 = vpack.c.bf16 %v934, %v931
        %v945 = vunpack.c.l.b16 %v937
        %v946 = vunpack.c.h.b16 %v937
        %v947 = vunpack.c.l.b16 %v938
        %v948 = vunpack.c.h.b16 %v938
        %v949 = vunpack.c.l.b16 %v939
        %v950 = vunpack.c.h.b16 %v939
        %v951 = vunpack.c.l.b16 %v940
        %v952 = vunpack.c.h.b16 %v940
        %v953 = vpack.c.b16 %v945, %v945
        %v954 = vpack.c.b16 %v946, %v946
        %v955 = vpack.c.b16 %v947, %v947
        %v956 = vpack.c.b16 %v948, %v948
        %v957 = vpack.c.b16 %v949, %v949
        %v958 = vpack.c.b16 %v950, %v950
        %v959 = vpack.c.b16 %v951, %v951
        %v960 = vpack.c.b16 %v952, %v952
        %969 = vst [vmem:[%s403] sm:$0xf] %v953
        %970 = vst [vmem:[%s403 + $0x4] sm:$0xf] %v954
        %971 = vst [vmem:[%s403 + $0x8] sm:$0xf] %v955
        %972 = vst [vmem:[%s403 + $0xc] sm:$0xf] %v956
        %973 = vst [vmem:[%s403 + $0x10] sm:$0xf] %v957
        %974 = vst [vmem:[%s403 + $0x14] sm:$0xf] %v958
        %975 = vst [vmem:[%s403 + $0x18] sm:$0xf] %v959
        %976 = vst [vmem:[%s403 + $0x1c] sm:$0xf] %v960
        %vm977 = vcmask 7168
        %978 = vst.msk [vmem:[%s442] sm:$0xff] %vm977, %v682
        %979 = vst.msk [vmem:[%s442 + $0x8] sm:$0xff] %vm977, %v684
        %980 = vst.msk [vmem:[%s442 + $0x10] sm:$0xff] %vm977, %v686
        %981 = vst.msk [vmem:[%s442 + $0x18] sm:$0xff] %vm977, %v688
        %982 = vst.msk [vmem:[%s442 + $0x20] sm:$0xff] %vm977, %v690
        %983 = vst.msk [vmem:[%s442 + $0x28] sm:$0xff] %vm977, %v692
        %984 = vst.msk [vmem:[%s442 + $0x30] sm:$0xff] %vm977, %v694
        %985 = vst.msk [vmem:[%s442 + $0x38] sm:$0xff] %vm977, %v696
        %987 = vset.pattern.permute.xlu0 0
        %988 = vperm.xlu0 %987, %v682
        %v989 = vpop.permute.xlu0 %988
        %992 = vset.pattern.permute.xlu0 0
        %993 = vperm.xlu0 %992, %v684
        %v994 = vpop.permute.xlu0 %993
        %997 = vset.pattern.permute.xlu0 0
        %998 = vperm.xlu0 %997, %v686
        %v999 = vpop.permute.xlu0 %998
        %1002 = vset.pattern.permute.xlu0 0
        %1003 = vperm.xlu0 %1002, %v688
        %v1004 = vpop.permute.xlu0 %1003
        %1007 = vset.pattern.permute.xlu0 0
        %1008 = vperm.xlu0 %1007, %v690
        %v1009 = vpop.permute.xlu0 %1008
        %1012 = vset.pattern.permute.xlu0 0
        %1013 = vperm.xlu0 %1012, %v692
        %v1014 = vpop.permute.xlu0 %1013
        %1017 = vset.pattern.permute.xlu0 0
        %1018 = vperm.xlu0 %1017, %v694
        %v1019 = vpop.permute.xlu0 %1018
        %1022 = vset.pattern.permute.xlu0 0
        %1023 = vperm.xlu0 %1022, %v696
        %v1024 = vpop.permute.xlu0 %1023
        %v1026 = vmul.f32 %v907, %v989
        %v1027 = vmul.f32 %v910, %v994
        %v1028 = vmul.f32 %v915, %v999
        %v1029 = vmul.f32 %v918, %v1004
        %v1030 = vmul.f32 %v923, %v1009
        %v1031 = vmul.f32 %v926, %v1014
        %v1032 = vmul.f32 %v931, %v1019
        %v1033 = vmul.f32 %v934, %v1024
        %v1034 = vpack.c.bf16 %v1027, %v1026
        %v1035 = vpack.c.bf16 %v1029, %v1028
        %v1036 = vpack.c.bf16 %v1031, %v1030
        %v1037 = vpack.c.bf16 %v1033, %v1032
        %v1042 = vunpack.c.l.b16 %v1034
        %v1043 = vunpack.c.h.b16 %v1034
        %v1044 = vunpack.c.l.b16 %v1035
        %v1045 = vunpack.c.h.b16 %v1035
        %v1046 = vunpack.c.l.b16 %v1036
        %v1047 = vunpack.c.h.b16 %v1036
        %v1048 = vunpack.c.l.b16 %v1037
        %v1049 = vunpack.c.h.b16 %v1037
        %v1050 = vpack.c.b16 %v1042, %v1042
        %v1051 = vpack.c.b16 %v1043, %v1043
        %v1052 = vpack.c.b16 %v1044, %v1044
        %v1053 = vpack.c.b16 %v1045, %v1045
        %v1054 = vpack.c.b16 %v1046, %v1046
        %v1055 = vpack.c.b16 %v1047, %v1047
        %v1056 = vpack.c.b16 %v1048, %v1048
        %v1057 = vpack.c.b16 %v1049, %v1049
        %1066 = vst [vmem:[%s423] sm:$0xf] %v1050
        %1067 = vst [vmem:[%s423 + $0x4] sm:$0xf] %v1051
        %1068 = vst [vmem:[%s423 + $0x8] sm:$0xf] %v1052
        %1069 = vst [vmem:[%s423 + $0xc] sm:$0xf] %v1053
        %1070 = vst [vmem:[%s423 + $0x10] sm:$0xf] %v1054
        %1071 = vst [vmem:[%s423 + $0x14] sm:$0xf] %v1055
        %1072 = vst [vmem:[%s423 + $0x18] sm:$0xf] %v1056
        %1073 = vst [vmem:[%s423 + $0x1c] sm:$0xf] %v1057
        %s1074 = sand.u32 %s179, 1
        %s1075 = scalar_lea.sflag [#allocation5], %s1074
        %s1076 = sand.u32 %s179, 1
        %s1077 = smul.addr %s1076, 2
        %s1078 = scalar_lea.vmem [#allocation8], %s1077
        %s1079 = sand.u32 %s32, 1
        %s1080 = scalar_lea.sflag [#allocation10], %s1079
        %s1081 = sand.u32 %s211, 1
        %s1082 = smul.addr %s1081, 32
        %s1083 = scalar_lea.vmem [#allocation9], %s1082
        %s1084 = smul.u32 %s38, 2
        %s1085 = sadd.s32 %s1084, %s39
        %s1086 = smul.u32 8, %s1085
        %p1087 = scmp.lt.s32.totalorder %s37, 1
        %s1088 = scalar_select %p1087, %s37, 1
        %p1089 = scmp.lt.s32.totalorder %s1086, 31
        %s1090 = scalar_select %p1089, %s1086, 31
        %s1091 = smul.addr %s1088, 32
        %s1092 = sadd.s32 %s1090, %s1091
        %s1093 = smul.addr %s1092, 8
        %s1094 = scalar_lea.vmem %s7, %s1093
        %s1095 = sand.u32 %s32, 1
        %s1096 = scalar_lea.sflag [#allocation10], %s1095
        %s1097 = sand.u32 %s275, 1
        %s1098 = smul.addr %s1097, 32
        %s1099 = scalar_lea.vmem [#allocation11], %s1098
        // Predicated region
        $region53: #{tpu_custom_call.1} parent=39 // pred_check
          %p1100 = pneg %p189
        $region54: #{tpu_custom_call.1} parent=39 // pred_check_branch
          %1102 = sbr.rel (%p1100) target = $region56
        $region55: #{tpu_custom_call.1} parent=39 // pred_region
          %s1103 = smul.u32 %s37, 2
          %s1104 = sadd.s32 %s1103, %s38
          %s1106 = ssub.s32 32, 32
          %1107 = vsyncadd %s1075, %s1106
          %s1108 = smul.addr %s1104, 2
          %s1109 = smul.addr %s1108, 16
          %s1110 = scalar_lea.hbm %s5, %s1109
          %s1112 = sshll.u32 %s1078, 4
          %s1113 = int_to_ptr.vmem [resolvable:$true] %s1112
          %1115 = dma.vmem_to_hbm [thread:$0]  %s1113, 32, %s1110, %s1075
        $region56: #{tpu_custom_call.1} parent=39 // pred_fallthru
          _
        // Predicated region
        $region57: #{tpu_custom_call.1} parent=39 // pred_check
          %p1116 = pneg %p221
        $region58: #{tpu_custom_call.1} parent=39 // pred_check_branch
          %1118 = sbr.rel (%p1116) target = $region60
        $region59: #{tpu_custom_call.1} parent=39 // pred_region
          %s1119 = smul.u32 %s38, 2
          %s1120 = sadd.s32 %s1119, %s39
          %s1121 = smul.u32 8, %s1120
          %s1123 = ssub.s32 512, 512
          %1124 = vsyncadd %s1080, %s1123
          %s1125 = smul.addr %s37, 32
          %s1126 = sadd.s32 %s1121, %s1125
          %s1127 = smul.addr %s1126, 64
          %s1128 = scalar_lea.hbm %s6, %s1127
          %s1129 = sshll.u32 %s1083, 4
          %s1130 = int_to_ptr.vmem [resolvable:$true] %s1129
          %1135 = dma.vmem_to_hbm [thread:$0]  %s1130, 512, %s1128, %s1080, 64, 64, 4
        $region60: #{tpu_custom_call.1} parent=39 // pred_fallthru
          _
        // Predicated region
        $region61: #{tpu_custom_call.1} parent=39 // pred_check
          %p1136 = pneg %p253
        $region62: #{tpu_custom_call.1} parent=39 // pred_check_branch
          %1138 = sbr.rel (%p1136) target = $region64
        $region63: #{tpu_custom_call.1} parent=39 // pred_region
          %s1139 = smul.u32 %s38, 2
          %s1140 = sadd.s32 %s1139, %s39
          %s1141 = smul.u32 8, %s1140
        $region64: #{tpu_custom_call.1} parent=39 // pred_fallthru
          _
        // Predicated region
        $region65: #{tpu_custom_call.1} parent=39 // pred_check
          %p1142 = pneg %p285
        $region66: #{tpu_custom_call.1} parent=39 // pred_check_branch
          %1144 = sbr.rel (%p1142) target = $region68
        $region67: #{tpu_custom_call.1} parent=39 // pred_region
          %s1145 = smul.u32 %s38, 2
          %s1146 = sadd.s32 %s1145, %s39
          %s1147 = smul.u32 8, %s1146
          %s1149 = ssub.s32 512, 512
          %1150 = vsyncadd %s1096, %s1149
          %s1151 = smul.addr %s37, 32
          %s1152 = sadd.s32 %s1147, %s1151
          %s1153 = smul.addr %s1152, 64
          %s1154 = scalar_lea.hbm %s8, %s1153
          %s1155 = sshll.u32 %s1099, 4
          %s1156 = int_to_ptr.vmem [resolvable:$true] %s1155
          %1161 = dma.vmem_to_hbm [thread:$0]  %s1156, 512, %s1154, %s1096, 64, 64, 4
        $region68: #{tpu_custom_call.1} parent=39 // pred_fallthru
          _
      $region40: #{tpu_custom_call.1} parent=5 // pred_fallthru
        _
      %p1162 = scmp.le.s32.totalorder 2, %s27
      // Predicated region
      $region69: #{tpu_custom_call.1} parent=5 // pred_check
        %p1163 = pneg %p1162
      $region70: #{tpu_custom_call.1} parent=5 // pred_check_branch
        %1165 = sbr.rel (%p1163) target = $region72
      $region71: #{tpu_custom_call.1} parent=5 // pred_region
        %s1166 = ssub.s32 %s27, 2
        // Predicated region
        $region73: #{tpu_custom_call.1} parent=71 // pred_check
          %p1167 = pneg %p195
        $region74: #{tpu_custom_call.1} parent=71 // pred_check_branch
          %1169 = sbr.rel (%p1167) target = $region76
        $region75: #{tpu_custom_call.1} parent=71 // pred_region
          %s1170 = sand.u32 %s180, 1
          %s1171 = scalar_lea.sflag [#allocation5], %s1170
          %s1172 = sand.u32 %s180, 1
          %s1173 = smul.addr %s1172, 2
          %s1174 = scalar_lea.vmem [#allocation8], %s1173
          %1175 = dma.done %s1171, 32
        $region76: #{tpu_custom_call.1} parent=71 // pred_fallthru
          _
        // Predicated region
        $region77: #{tpu_custom_call.1} parent=71 // pred_check
          %p1176 = pneg %p227
        $region78: #{tpu_custom_call.1} parent=71 // pred_check_branch
          %1178 = sbr.rel (%p1176) target = $region80
        $region79: #{tpu_custom_call.1} parent=71 // pred_region
          %s1179 = sand.u32 %s33, 1
          %s1180 = scalar_lea.sflag [#allocation10], %s1179
          %s1181 = sand.u32 %s212, 1
          %s1182 = smul.addr %s1181, 32
          %s1183 = scalar_lea.vmem [#allocation9], %s1182
          %1184 = dma.done %s1180, 512
        $region80: #{tpu_custom_call.1} parent=71 // pred_fallthru
          _
        // Predicated region
        $region81: #{tpu_custom_call.1} parent=71 // pred_check
          %p1185 = pneg %p259
        $region82: #{tpu_custom_call.1} parent=71 // pred_check_branch
          %1187 = sbr.rel (%p1185) target = $region84
        $region83: #{tpu_custom_call.1} parent=71 // pred_region
          %s1188 = smul.u32 %s41, 2
          %s1189 = sadd.s32 %s1188, %s42
          %s1190 = smul.u32 8, %s1189
          %p1191 = scmp.lt.s32.totalorder %s40, 1
          %s1192 = scalar_select %p1191, %s40, 1
          %p1193 = scmp.lt.s32.totalorder %s1190, 31
          %s1194 = scalar_select %p1193, %s1190, 31
          %s1195 = smul.addr %s1192, 32
          %s1196 = sadd.s32 %s1194, %s1195
          %s1197 = smul.addr %s1196, 8
          %s1198 = scalar_lea.vmem %s7, %s1197
        $region84: #{tpu_custom_call.1} parent=71 // pred_fallthru
          _
        // Predicated region
        $region85: #{tpu_custom_call.1} parent=71 // pred_check
          %p1199 = pneg %p291
        $region86: #{tpu_custom_call.1} parent=71 // pred_check_branch
          %1201 = sbr.rel (%p1199) target = $region88
        $region87: #{tpu_custom_call.1} parent=71 // pred_region
          %s1202 = sand.u32 %s33, 1
          %s1203 = scalar_lea.sflag [#allocation10], %s1202
          %s1204 = sand.u32 %s276, 1
          %s1205 = smul.addr %s1204, 32
          %s1206 = scalar_lea.vmem [#allocation11], %s1205
          %1207 = dma.done %s1203, 512
        $region88: #{tpu_custom_call.1} parent=71 // pred_fallthru
          _
      $region72: #{tpu_custom_call.1} parent=5 // pred_fallthru
        _
    $region6: #{tpu_custom_call.1} parent=1 // loop_footer
      %s31 = sadd.s32 1, %s27
    $region7: #{tpu_custom_call.1} parent=1 // loop_footer_branch
      %26 = sbr.rel target = $region3
    $region8: #{tpu_custom_call.1} parent=1 // loop_exit
      _
    %1208 = vsyncpa [#allocation4], 1
    %s1209 = scalar_lea.sflag [#allocation4], 1
    %1210 = vsyncpa %s1209, 1
    %1211 = vsyncpa [#allocation7], 1
    %1212 = vsyncpa [#allocation5], 1
    %s1213 = scalar_lea.sflag [#allocation5], 1
    %1214 = vsyncpa %s1213, 1
    %1215 = vsyncpa [#allocation10], 1
    %s1216 = scalar_lea.sflag [#allocation10], 1
    %1217 = vsyncpa %s1216, 1

</llo_original>
